<compile_context>
chip_gen: v7x
topology: tpu7x:2x2x1
jax: 0.10.0
libtpu: 0.0.40
codegen_flags: <defaults>
</compile_context>

<pallas_src>
import functools

import jax
import jax.numpy as jnp
from jax.experimental import pallas as pl
from jax.experimental.pallas import tpu as pltpu


def _round_up(n, m):
    return ((n + m - 1) // m) * m


# ----------------------------------------------------------------------------- kernel


def _make_actor_kernel(h_pad, out_pad):
    def actor_kernel(x_ref, w1_ref, w2_ref, w3_ref, wo_ref, bvec_ref, out_ref):
        x = x_ref[...]                     # (TB, in_pad)  f32
        bvec = bvec_ref[...]               # (8, 128)      f32
        b1 = bvec[0:1, :h_pad]
        b2 = bvec[1:2, :h_pad]
        b3 = bvec[2:3, :h_pad]
        bo = bvec[3:4, :out_pad]
        ah = bvec[4:5, :out_pad]

        # fc1 + relu (f32 matmul on MXU, f32 accumulate / elementwise)
        h = jnp.dot(x, w1_ref[...], preferred_element_type=jnp.float32) + b1
        h = jnp.maximum(h, 0.0)
        # fc2 + relu
        h = jnp.dot(h, w2_ref[...], preferred_element_type=jnp.float32) + b2
        h = jnp.maximum(h, 0.0)
        # fc3 + relu
        h = jnp.dot(h, w3_ref[...], preferred_element_type=jnp.float32) + b3
        h = jnp.maximum(h, 0.0)
        # fc_out + tanh + action scaling (lane-dense store, padded lanes are 0)
        y = jnp.dot(h, wo_ref[...], preferred_element_type=jnp.float32) + bo
        out_ref[...] = jnp.tanh(y) * ah

    return actor_kernel


# ----------------------------------------------------------------------------- params


def xavier_uniform(key, fan_in, fan_out, gain):
    # matches torch.nn.init.xavier_uniform_ with gain=calculate_gain('relu')=sqrt(2)
    bound = gain * jnp.sqrt(6.0 / (fan_in + fan_out))
    return jax.random.uniform(key, (fan_in, fan_out), jnp.float32, -bound, bound)


def init_actor_params(key, num_inputs, hidden_size, num_outputs):
    gain = jnp.sqrt(2.0)
    k1, k2, k3, k4 = jax.random.split(key, 4)
    w1 = xavier_uniform(k1, num_inputs, hidden_size, gain)
    w2 = xavier_uniform(k2, hidden_size, hidden_size, gain)
    w3 = xavier_uniform(k3, hidden_size, hidden_size, gain)
    wo = xavier_uniform(k4, hidden_size, num_outputs, gain)
    b1 = jnp.zeros((hidden_size,), jnp.float32)
    b2 = jnp.zeros((hidden_size,), jnp.float32)
    b3 = jnp.zeros((hidden_size,), jnp.float32)
    bo = jnp.zeros((num_outputs,), jnp.float32)
    return (w1, b1, w2, b2, w3, b3, wo, bo)


def pack_actor_params(params, action_high, num_inputs, hidden_size, num_outputs):
    """Pad the f32 params into kernel-friendly operands (done once, host-side)."""
    w1, b1, w2, b2, w3, b3, wo, bo = params
    in_pad = _round_up(num_inputs, 32)                 # 17 -> 32
    h_pad = _round_up(hidden_size, 32)                 # 32 -> 32
    out_pad = _round_up(num_outputs, 128)              # 6  -> 128 (lane-dense stores)
    slab_w = max(_round_up(h_pad, 128), out_pad)       # 128

    w1p = jnp.zeros((in_pad, h_pad), jnp.float32).at[:num_inputs, :hidden_size].set(w1)
    w2p = jnp.zeros((h_pad, h_pad), jnp.float32).at[:hidden_size, :hidden_size].set(w2)
    w3p = jnp.zeros((h_pad, h_pad), jnp.float32).at[:hidden_size, :hidden_size].set(w3)
    wop = jnp.zeros((h_pad, out_pad), jnp.float32).at[:hidden_size, :num_outputs].set(wo)

    bvec = jnp.zeros((8, slab_w), jnp.float32)
    bvec = bvec.at[0, :hidden_size].set(b1.reshape(-1))
    bvec = bvec.at[1, :hidden_size].set(b2.reshape(-1))
    bvec = bvec.at[2, :hidden_size].set(b3.reshape(-1))
    bvec = bvec.at[3, :num_outputs].set(bo.reshape(-1))
    bvec = bvec.at[4, :num_outputs].set(jnp.asarray(action_high, jnp.float32).reshape(-1))

    return (w1p, w2p, w3p, wop, bvec)


# ----------------------------------------------------------------------------- wrapper


@functools.partial(jax.jit, static_argnames=("num_outputs", "block_b"))
def actor_forward(x, packed, num_outputs, block_b=512):
    """x: (B, num_inputs) f32 -> (B, num_outputs) f32."""
    w1p, w2p, w3p, wop, bvec = packed
    B, nin = x.shape
    in_pad, h_pad = w1p.shape
    out_pad = wop.shape[1]

    block_b = _round_up(block_b, 8)
    tb = min(block_b, _round_up(B, 8))
    b_pad = _round_up(B, tb)

    # Zero-pad batch + feature dims (f32 activations, f32 matmuls in-kernel).
    xp = jnp.zeros((b_pad, in_pad), jnp.float32)
    xp = xp.at[:B, :nin].set(x)

    kernel = _make_actor_kernel(h_pad, out_pad)
    out = pl.pallas_call(
        kernel,
        out_shape=jax.ShapeDtypeStruct((b_pad, out_pad), jnp.float32),
        grid=(b_pad // tb,),
        in_specs=[
            pl.BlockSpec((tb, in_pad), lambda i: (i, 0)),       # streamed activations
            pl.BlockSpec((in_pad, h_pad), lambda i: (0, 0)),    # resident weights
            pl.BlockSpec((h_pad, h_pad), lambda i: (0, 0)),
            pl.BlockSpec((h_pad, h_pad), lambda i: (0, 0)),
            pl.BlockSpec((h_pad, out_pad), lambda i: (0, 0)),
            pl.BlockSpec(bvec.shape, lambda i: (0, 0)),         # packed biases + action_high
        ],
        out_specs=pl.BlockSpec((tb, out_pad), lambda i: (i, 0)),
        compiler_params=pltpu.CompilerParams(
            dimension_semantics=("parallel",),                  # megacore batch sharding
        ),
    )(xp, w1p, w2p, w3p, wop, bvec)

    return out[:B, :num_outputs]


# ----------------------------------------------------------------------------- reference


def actor_reference_f32(x, params, action_high):
    w1, b1, w2, b2, w3, b3, wo, bo = params
    hi = jax.lax.Precision.HIGHEST

    def mm(a, w):
        return jnp.dot(a, w, precision=hi)

    h = jnp.maximum(mm(x, w1) + b1, 0.0)
    h = jnp.maximum(mm(h, w2) + b2, 0.0)
    h = jnp.maximum(mm(h, w3) + b3, 0.0)
    return jnp.tanh(mm(h, wo) + bo) * action_high


# ----------------------------------------------------------------------------- main


if __name__ == "__main__":
    # HalfCheetah-like sizes: obs dim 17, action dim 6, hidden 32.
    num_inputs, hidden_size, num_outputs = 17, 32, 6

    key = jax.random.PRNGKey(0)
    k_params, k_x_small, k_x_big = jax.random.split(key, 3)

    params = init_actor_params(k_params, num_inputs, hidden_size, num_outputs)
    # action_space.high for HalfCheetah is all ones; use non-trivial values to
    # exercise the final scaling path.
    action_high = jnp.linspace(0.5, 1.5, num_outputs, dtype=jnp.float32)

    packed = pack_actor_params(params, action_high, num_inputs, hidden_size, num_outputs)

    # Small sanity batch + a larger batch that exercises the batch-tiled grid.
    for bkey, batch in ((k_x_small, 2), (k_x_big, 1024)):
        x = jax.random.normal(bkey, (batch, num_inputs), jnp.float32)

        out = actor_forward(x, packed, num_outputs=num_outputs)
        out = jax.block_until_ready(out)
        assert out.shape == (batch, num_outputs)

        ref32 = actor_reference_f32(x, params, action_high)    # full-f32 module semantics
        err = float(jnp.max(jnp.abs(out - ref32)))
        assert jnp.allclose(out, ref32, atol=1e-4, rtol=1e-4), err

    print("KERNEL_OK")
</pallas_src>

<mosaic_0001>
module attributes {stable_mosaic.version = 11 : i64} {
  func.func @actor_kernel(%arg0: i32, %arg1: memref<8x32xf32, #tpu.memory_space<vmem>>, %arg2: memref<32x32xf32, #tpu.memory_space<vmem>>, %arg3: memref<32x32xf32, #tpu.memory_space<vmem>>, %arg4: memref<32x32xf32, #tpu.memory_space<vmem>>, %arg5: memref<32x128xf32, #tpu.memory_space<vmem>>, %arg6: memref<8x128xf32, #tpu.memory_space<vmem>>, %arg7: memref<8x128xf32, #tpu.memory_space<vmem>>) attributes {dimension_semantics = [#tpu.dimension_semantics<parallel>], iteration_bounds = array<i64: 1>, scalar_prefetch = 0 : i64, scratch_operands = 0 : i64, tpu.core_type = #tpu.core_type<tc>, window_params = [{transform_indices = @transform_0, window_bounds = array<i64: 8, 32>}, {pipeline_mode = #tpu.pipeline_mode<synchronous>, transform_indices = @transform_1, window_bounds = array<i64: 32, 32>}, {pipeline_mode = #tpu.pipeline_mode<synchronous>, transform_indices = @transform_2, window_bounds = array<i64: 32, 32>}, {pipeline_mode = #tpu.pipeline_mode<synchronous>, transform_indices = @transform_3, window_bounds = array<i64: 32, 32>}, {pipeline_mode = #tpu.pipeline_mode<synchronous>, transform_indices = @transform_4, window_bounds = array<i64: 32, 128>}, {pipeline_mode = #tpu.pipeline_mode<synchronous>, transform_indices = @transform_5, window_bounds = array<i64: 8, 128>}, {transform_indices = @transform_6, window_bounds = array<i64: 8, 128>}]} {
    %c0 = arith.constant 0 : index
    %c0_0 = arith.constant 0 : index
    %0 = vector.load %arg1[%c0, %c0_0] : memref<8x32xf32, #tpu.memory_space<vmem>>, vector<8x32xf32>
    %c0_1 = arith.constant 0 : index
    %c0_2 = arith.constant 0 : index
    %1 = vector.load %arg6[%c0_1, %c0_2] : memref<8x128xf32, #tpu.memory_space<vmem>>, vector<8x128xf32>
    %2 = vector.extract_strided_slice %1 {offsets = [0, 0], sizes = [1, 32], strides = [1, 1]} : vector<8x128xf32> to vector<1x32xf32>
    %3 = vector.extract_strided_slice %1 {offsets = [1, 0], sizes = [1, 32], strides = [1, 1]} : vector<8x128xf32> to vector<1x32xf32>
    %4 = vector.extract_strided_slice %1 {offsets = [2, 0], sizes = [1, 32], strides = [1, 1]} : vector<8x128xf32> to vector<1x32xf32>
    %5 = vector.extract_strided_slice %1 {offsets = [3, 0], sizes = [1, 128], strides = [1, 1]} : vector<8x128xf32> to vector<1x128xf32>
    %6 = vector.extract_strided_slice %1 {offsets = [4, 0], sizes = [1, 128], strides = [1, 1]} : vector<8x128xf32> to vector<1x128xf32>
    %c0_3 = arith.constant 0 : index
    %c0_4 = arith.constant 0 : index
    %7 = vector.load %arg2[%c0_3, %c0_4] : memref<32x32xf32, #tpu.memory_space<vmem>>, vector<32x32xf32>
    %cst = arith.constant dense<0.000000e+00> : vector<8x32xf32>
    %8 = tpu.matmul %0, %7, %cst {dimension_numbers = #tpu.dot_dimension_numbers<[1], [0], [0], [1], [0, 0, 1, 1], [], []>} : vector<8x32xf32>, vector<32x32xf32>, vector<8x32xf32> -> vector<8x32xf32>
    %9 = vector.broadcast %2 : vector<1x32xf32> to vector<8x32xf32>
    %10 = arith.addf %8, %9 : vector<8x32xf32>
    %cst_5 = arith.constant 0.000000e+00 : f32
    %11 = vector.broadcast %cst_5 : f32 to vector<8x32xf32>
    %12 = arith.maximumf %10, %11 : vector<8x32xf32>
    %c0_6 = arith.constant 0 : index
    %c0_7 = arith.constant 0 : index
    %13 = vector.load %arg3[%c0_6, %c0_7] : memref<32x32xf32, #tpu.memory_space<vmem>>, vector<32x32xf32>
    %cst_8 = arith.constant dense<0.000000e+00> : vector<8x32xf32>
    %14 = tpu.matmul %12, %13, %cst_8 {dimension_numbers = #tpu.dot_dimension_numbers<[1], [0], [0], [1], [0, 0, 1, 1], [], []>} : vector<8x32xf32>, vector<32x32xf32>, vector<8x32xf32> -> vector<8x32xf32>
    %15 = vector.broadcast %3 : vector<1x32xf32> to vector<8x32xf32>
    %16 = arith.addf %14, %15 : vector<8x32xf32>
    %cst_9 = arith.constant 0.000000e+00 : f32
    %17 = vector.broadcast %cst_9 : f32 to vector<8x32xf32>
    %18 = arith.maximumf %16, %17 : vector<8x32xf32>
    %c0_10 = arith.constant 0 : index
    %c0_11 = arith.constant 0 : index
    %19 = vector.load %arg4[%c0_10, %c0_11] : memref<32x32xf32, #tpu.memory_space<vmem>>, vector<32x32xf32>
    %cst_12 = arith.constant dense<0.000000e+00> : vector<8x32xf32>
    %20 = tpu.matmul %18, %19, %cst_12 {dimension_numbers = #tpu.dot_dimension_numbers<[1], [0], [0], [1], [0, 0, 1, 1], [], []>} : vector<8x32xf32>, vector<32x32xf32>, vector<8x32xf32> -> vector<8x32xf32>
    %21 = vector.broadcast %4 : vector<1x32xf32> to vector<8x32xf32>
    %22 = arith.addf %20, %21 : vector<8x32xf32>
    %cst_13 = arith.constant 0.000000e+00 : f32
    %23 = vector.broadcast %cst_13 : f32 to vector<8x32xf32>
    %24 = arith.maximumf %22, %23 : vector<8x32xf32>
    %c0_14 = arith.constant 0 : index
    %c0_15 = arith.constant 0 : index
    %25 = vector.load %arg5[%c0_14, %c0_15] : memref<32x128xf32, #tpu.memory_space<vmem>>, vector<32x128xf32>
    %cst_16 = arith.constant dense<0.000000e+00> : vector<8x128xf32>
    %26 = tpu.matmul %24, %25, %cst_16 {dimension_numbers = #tpu.dot_dimension_numbers<[1], [0], [0], [1], [0, 0, 1, 1], [], []>} : vector<8x32xf32>, vector<32x128xf32>, vector<8x128xf32> -> vector<8x128xf32>
    %27 = vector.broadcast %5 : vector<1x128xf32> to vector<8x128xf32>
    %28 = arith.addf %26, %27 : vector<8x128xf32>
    %29 = math.tanh %28 : vector<8x128xf32>
    %30 = vector.broadcast %6 : vector<1x128xf32> to vector<8x128xf32>
    %31 = arith.mulf %29, %30 : vector<8x128xf32>
    %c0_17 = arith.constant 0 : index
    %c0_18 = arith.constant 0 : index
    %32 = vector.load %arg7[%c0_17, %c0_18] : memref<8x128xf32, #tpu.memory_space<vmem>>, vector<8x128xf32>
    tpu.vector_store %arg7[%c0_17, %c0_18], %31 {strides = array<i32>} : memref<8x128xf32, #tpu.memory_space<vmem>>, vector<8x128xf32>,
    return
  }
  func.func @transform_0(%arg0: i32) -> (i32, i32) {
    %c0_i32 = arith.constant 0 : i32
    %c0_i32_0 = arith.constant 0 : i32
    return %arg0, %c0_i32 : i32, i32
  }
  func.func @transform_1(%arg0: i32) -> (i32, i32) {
    %c0_i32 = arith.constant 0 : i32
    %c0_i32_0 = arith.constant 0 : i32
    %c0_i32_1 = arith.constant 0 : i32
    return %c0_i32, %c0_i32_0 : i32, i32
  }
  func.func @transform_2(%arg0: i32) -> (i32, i32) {
    %c0_i32 = arith.constant 0 : i32
    %c0_i32_0 = arith.constant 0 : i32
    %c0_i32_1 = arith.constant 0 : i32
    return %c0_i32, %c0_i32_0 : i32, i32
  }
  func.func @transform_3(%arg0: i32) -> (i32, i32) {
    %c0_i32 = arith.constant 0 : i32
    %c0_i32_0 = arith.constant 0 : i32
    %c0_i32_1 = arith.constant 0 : i32
    return %c0_i32, %c0_i32_0 : i32, i32
  }
  func.func @transform_4(%arg0: i32) -> (i32, i32) {
    %c0_i32 = arith.constant 0 : i32
    %c0_i32_0 = arith.constant 0 : i32
    %c0_i32_1 = arith.constant 0 : i32
    return %c0_i32, %c0_i32_0 : i32, i32
  }
  func.func @transform_5(%arg0: i32) -> (i32, i32) {
    %c0_i32 = arith.constant 0 : i32
    %c0_i32_0 = arith.constant 0 : i32
    %c0_i32_1 = arith.constant 0 : i32
    return %c0_i32, %c0_i32_0 : i32, i32
  }
  func.func @transform_6(%arg0: i32) -> (i32, i32) {
    %c0_i32 = arith.constant 0 : i32
    %c0_i32_0 = arith.constant 0 : i32
    return %arg0, %c0_i32 : i32, i32
  }
}

</mosaic_0001>

<llo_original>
// kernel: actor_forward.1
$region0: #{actor_forward.1}
  #allocation0 [shape = 'u32[]', space=smem, size = 0x4, offset = 0x4, fixed_abs, tag = 'smem constant byte address 0x4 - core index']
  #allocation1 [shape = 'u32[144,128]{1,0:T(1,128)}', space=vmem, size = 0x12000, scoped, tag = 'internal scratch']
  %s0 = inlined_call_operand.vmem [shape: f32[8,32], index: 0, kind: input, shape index: {}]
  %s1 = inlined_call_operand.hbm [shape: f32[32,32], index: 1, kind: input, shape index: {}]
  %s2 = inlined_call_operand.hbm [shape: f32[32,32], index: 2, kind: input, shape index: {}]
  %s3 = inlined_call_operand.hbm [shape: f32[32,32], index: 3, kind: input, shape index: {}]
  %s4 = inlined_call_operand.hbm [shape: f32[32,128], index: 4, kind: input, shape index: {}]
  %s5 = inlined_call_operand.vmem [shape: f32[8,128], index: 5, kind: input, shape index: {}]
  %s6 = inlined_call_operand.vmem [shape: f32[8,128], index: 6, kind: output, shape index: {}]
  %s7 = sld [smem:[#allocation0]]
  $region50: #{actor_forward.1} parent=0
    _
  %s9 = ssub.s32 1, %s7
  %s10 = scalar_select 0, %s9, %s7
  $region1: #{actor_forward.1} parent=0
    #allocation2 [shape = 'u8[16384]{0}', space=vmem, size = 0x4000, scoped, tag = 'input window, operand 1, single buffered']
    #allocation3 [shape = 's32[1]{0}', space=sflag, size = 0x4, scoped, tag = 'scoped memory for actor_forward.1']
    #allocation4 [shape = 'u8[16384]{0}', space=vmem, size = 0x4000, scoped, tag = 'input window, operand 2, single buffered']
    #allocation5 [shape = 's32[1]{0}', space=sflag, size = 0x4, scoped, tag = 'scoped memory for actor_forward.1']
    #allocation6 [shape = 'u8[16384]{0}', space=vmem, size = 0x4000, scoped, tag = 'input window, operand 3, single buffered']
    #allocation7 [shape = 'u8[16384]{0}', space=vmem, size = 0x4000, scoped, tag = 'input window, operand 4, single buffered']
    #allocation8 [shape = 's32[1]{0}', space=sflag, size = 0x4, scoped, tag = 'scoped memory for actor_forward.1']
    %11 = vsyncpa [#allocation3], 0
    %12 = vsyncpa [#allocation5], 0
    %13 = vsyncpa [#allocation8], 0
    // Predicated region
    $region2: #{actor_forward.1} parent=1 // pred_check
      _
    $region3: #{actor_forward.1} parent=1 // pred_check_branch
      %15 = sbr.rel (0) target = $region5
    $region4: #{actor_forward.1} parent=1 // pred_region
      _
    $region5: #{actor_forward.1} parent=1 // pred_fallthru
      _
    // Predicated region
    $region6: #{actor_forward.1} parent=1 // pred_check
      _
    $region7: #{actor_forward.1} parent=1 // pred_check_branch
      %17 = sbr.rel (0) target = $region9
    $region8: #{actor_forward.1} parent=1 // pred_region
      %s19 = ssub.s32 512, 512
      %20 = vsyncadd [#allocation3], %s19
      %s21 = sshll.u32 [#allocation2], 4
      %s22 = int_to_ptr.vmem [resolvable:$true] %s21
      %27 = dma.hbm_to_vmem [thread:$0]  %s1, 512, %s22, [#allocation3], 128, 128, 8
    $region9: #{actor_forward.1} parent=1 // pred_fallthru
      _
    // Predicated region
    $region10: #{actor_forward.1} parent=1 // pred_check
      _
    $region11: #{actor_forward.1} parent=1 // pred_check_branch
      %29 = sbr.rel (0) target = $region13
    $region12: #{actor_forward.1} parent=1 // pred_region
      %s31 = ssub.s32 512, 512
      %32 = vsyncadd [#allocation5], %s31
      %s33 = sshll.u32 [#allocation4], 4
      %s34 = int_to_ptr.vmem [resolvable:$true] %s33
      %39 = dma.hbm_to_vmem [thread:$0]  %s2, 512, %s34, [#allocation5], 128, 128, 8
    $region13: #{actor_forward.1} parent=1 // pred_fallthru
      _
    // Predicated region
    $region14: #{actor_forward.1} parent=1 // pred_check
      _
    $region15: #{actor_forward.1} parent=1 // pred_check_branch
      %41 = sbr.rel (0) target = $region17
    $region16: #{actor_forward.1} parent=1 // pred_region
      %s43 = ssub.s32 512, 512
      %44 = vsyncadd [#allocation5], %s43
      %s45 = sshll.u32 [#allocation6], 4
      %s46 = int_to_ptr.vmem [resolvable:$true] %s45
      %51 = dma.hbm_to_vmem [thread:$0]  %s3, 512, %s46, [#allocation5], 128, 128, 8
    $region17: #{actor_forward.1} parent=1 // pred_fallthru
      _
    // Predicated region
    $region18: #{actor_forward.1} parent=1 // pred_check
      _
    $region19: #{actor_forward.1} parent=1 // pred_check_branch
      %53 = sbr.rel (0) target = $region21
    $region20: #{actor_forward.1} parent=1 // pred_region
      %s55 = ssub.s32 512, 512
      %56 = vsyncadd [#allocation8], %s55
      %s57 = sshll.u32 [#allocation7], 4
      %s58 = int_to_ptr.vmem [resolvable:$true] %s57
      %63 = dma.hbm_to_vmem [thread:$0]  %s4, 512, %s58, [#allocation8], 128, 128, 8
    $region21: #{actor_forward.1} parent=1 // pred_fallthru
      _
    // Predicated region
    $region22: #{actor_forward.1} parent=1 // pred_check
      _
    $region23: #{actor_forward.1} parent=1 // pred_check_branch
      %65 = sbr.rel (0) target = $region25
    $region24: #{actor_forward.1} parent=1 // pred_region
      _
    $region25: #{actor_forward.1} parent=1 // pred_fallthru
      _
    // Predicated region
    $region26: #{actor_forward.1} parent=1 // pred_check
      _
    $region27: #{actor_forward.1} parent=1 // pred_check_branch
      %67 = sbr.rel (0) target = $region29
    $region28: #{actor_forward.1} parent=1 // pred_region
      %68 = dma.done [#allocation3], 512
    $region29: #{actor_forward.1} parent=1 // pred_fallthru
      _
    // Predicated region
    $region30: #{actor_forward.1} parent=1 // pred_check
      _
    $region31: #{actor_forward.1} parent=1 // pred_check_branch
      %70 = sbr.rel (0) target = $region33
    $region32: #{actor_forward.1} parent=1 // pred_region
      %71 = dma.done [#allocation5], 512
    $region33: #{actor_forward.1} parent=1 // pred_fallthru
      _
    // Predicated region
    $region34: #{actor_forward.1} parent=1 // pred_check
      _
    $region35: #{actor_forward.1} parent=1 // pred_check_branch
      %73 = sbr.rel (0) target = $region37
    $region36: #{actor_forward.1} parent=1 // pred_region
      %74 = dma.done [#allocation5], 512
    $region37: #{actor_forward.1} parent=1 // pred_fallthru
      _
    // Predicated region
    $region38: #{actor_forward.1} parent=1 // pred_check
      _
    $region39: #{actor_forward.1} parent=1 // pred_check_branch
      %76 = sbr.rel (0) target = $region41
    $region40: #{actor_forward.1} parent=1 // pred_region
      %77 = dma.done [#allocation8], 512
    $region41: #{actor_forward.1} parent=1 // pred_fallthru
      _
    %v78 = vld [vmem:[%s0] sm:$0xff]
    %v79 = vld [vmem:[%s5] sm:$0xff]
    %v80 = vld [vmem:[#allocation2] sm:$0xff]
    %v81 = vld [vmem:[#allocation2 + $0x8] sm:$0xff]
    %v82 = vld [vmem:[#allocation2 + $0x10] sm:$0xff]
    %v83 = vld [vmem:[#allocation2 + $0x18] sm:$0xff]
    %v84 = vlaneseq
    %v85 = vshrl.u32 %v84, 7
    %v86 = vsub.s32 0, %v85
    %v87 = vrot.slane %v79, %v86
    %vm88 = vcmask 261120
    %v90 = vsel %vm88, %v78, 0
    %92 = vmatprep.subr.mxu0 0.0
    %93 = vmatpush1.msra.mxu0 %v80
    %94 = vmatprep.subr.mxu0 0.0
    %95 = vmatpush1.msra.mxu0 %v81
    %96 = vmatprep.subr.mxu0 0.0
    %97 = vmatpush1.msra.mxu0 %v82
    %98 = vmatprep.subr.mxu0 0.0
    %99 = vmatpush1.msra.mxu0 %v83
    %100 = vmatprep.subr.mxu0 0.0
    %101 = vmatpush1.msra.mxu0 0.0
    %102 = vmatprep.subr.mxu0 0.0
    %103 = vmatpush1.msra.mxu0 0.0
    %104 = vmatprep.subr.mxu0 0.0
    %105 = vmatpush1.msra.mxu0 0.0
    %106 = vmatprep.subr.mxu0 0.0
    %107 = vmatpush1.msra.mxu0 0.0
    %108 = vmatprep.subr.mxu0 0.0
    %109 = vmatpush1.msra.mxu0 0.0
    %110 = vmatprep.subr.mxu0 0.0
    %111 = vmatpush1.msra.mxu0 0.0
    %112 = vmatprep.subr.mxu0 0.0
    %113 = vmatpush1.msra.mxu0 0.0
    %114 = vmatprep.subr.mxu0 0.0
    %115 = vmatpush1.msra.mxu0 0.0
    %116 = vmatprep.subr.mxu0 0.0
    %117 = vmatpush1.msra.mxu0 0.0
    %118 = vmatprep.subr.mxu0 0.0
    %119 = vmatpush1.msra.mxu0 0.0
    %120 = vmatprep.subr.mxu0 0.0
    %121 = vmatpush1.msra.mxu0 0.0
    %122 = vmatprep.subr.mxu0 0.0
    %123 = vmatpush1.msra.mxu0 0.0
    %124 = vmatprep.subr.mxu0 0.0
    %125 = vmatpush1.msra.mxu0 0.0
    %126 = vmatprep.subr.mxu0 0.0
    %127 = vmatpush1.msra.mxu0 0.0
    %128 = vmatprep.subr.mxu0 0.0
    %129 = vmatpush1.msra.mxu0 0.0
    %130 = vmatprep.subr.mxu0 0.0
    %131 = vmatpush1.msra.mxu0 0.0
    %132 = vmatprep.subr.mxu0 0.0
    %133 = vmatpush1.msra.mxu0 0.0
    %134 = vmatprep.subr.mxu0 0.0
    %135 = vmatpush1.msra.mxu0 0.0
    %136 = vmatprep.subr.mxu0 0.0
    %137 = vmatpush1.msra.mxu0 0.0
    %138 = vmatprep.subr.mxu0 0.0
    %139 = vmatpush1.msra.mxu0 0.0
    %140 = vmatprep.subr.mxu0 0.0
    %141 = vmatpush1.msra.mxu0 0.0
    %142 = vmatprep.subr.mxu0 0.0
    %143 = vmatpush1.msra.mxu0 0.0
    %144 = vmatprep.subr.mxu0 0.0
    %145 = vmatpush1.msra.mxu0 0.0
    %146 = vmatprep.subr.mxu0 0.0
    %147 = vmatpush1.msra.mxu0 0.0
    %148 = vmatprep.subr.mxu0 0.0
    %149 = vmatpush1.msra.mxu0 0.0
    %150 = vmatprep.subr.mxu0 0.0
    %151 = vmatpush1.msra.mxu0 0.0
    %152 = vmatprep.subr.mxu0 0.0
    %153 = vmatpush1.msra.mxu0 0.0
    %154 = vmatprep.subr.mxu0 0.0
    %155 = vmatpush1.msra.mxu0 0.0
    %156 = vmatprep.mubr.f32.mxu0 0.0
    %157 = vmatmul.mubr.f32.gmra.mrb[0].mxu0 %v90
    %v158 = vpop.f32.mrb[0].mxu0
    %v159 = vadd.f32 %v87, %v158
    %v160 = vpop.f32.mrb[0].mxu0
    %161 = vdwg.mxu0
    %v162 = vmax.f32 %v159, 0.0
    %v163 = vld [vmem:[#allocation4] sm:$0xff]
    %v164 = vld [vmem:[#allocation4 + $0x8] sm:$0xff]
    %v165 = vld [vmem:[#allocation4 + $0x10] sm:$0xff]
    %v166 = vld [vmem:[#allocation4 + $0x18] sm:$0xff]
    %v167 = vlaneseq
    %v168 = vshrl.u32 %v167, 7
    %v169 = vsub.s32 1, %v168
    %v170 = vrot.slane %v79, %v169
    %v172 = vsel %vm88, %v162, 0
    %174 = vmatprep.subr.mxu0 0.0
    %175 = vmatpush1.msra.mxu0 %v163
    %176 = vmatprep.subr.mxu0 0.0
    %177 = vmatpush1.msra.mxu0 %v164
    %178 = vmatprep.subr.mxu0 0.0
    %179 = vmatpush1.msra.mxu0 %v165
    %180 = vmatprep.subr.mxu0 0.0
    %181 = vmatpush1.msra.mxu0 %v166
    %182 = vmatprep.subr.mxu0 0.0
    %183 = vmatpush1.msra.mxu0 0.0
    %184 = vmatprep.subr.mxu0 0.0
    %185 = vmatpush1.msra.mxu0 0.0
    %186 = vmatprep.subr.mxu0 0.0
    %187 = vmatpush1.msra.mxu0 0.0
    %188 = vmatprep.subr.mxu0 0.0
    %189 = vmatpush1.msra.mxu0 0.0
    %190 = vmatprep.subr.mxu0 0.0
    %191 = vmatpush1.msra.mxu0 0.0
    %192 = vmatprep.subr.mxu0 0.0
    %193 = vmatpush1.msra.mxu0 0.0
    %194 = vmatprep.subr.mxu0 0.0
    %195 = vmatpush1.msra.mxu0 0.0
    %196 = vmatprep.subr.mxu0 0.0
    %197 = vmatpush1.msra.mxu0 0.0
    %198 = vmatprep.subr.mxu0 0.0
    %199 = vmatpush1.msra.mxu0 0.0
    %200 = vmatprep.subr.mxu0 0.0
    %201 = vmatpush1.msra.mxu0 0.0
    %202 = vmatprep.subr.mxu0 0.0
    %203 = vmatpush1.msra.mxu0 0.0
    %204 = vmatprep.subr.mxu0 0.0
    %205 = vmatpush1.msra.mxu0 0.0
    %206 = vmatprep.subr.mxu0 0.0
    %207 = vmatpush1.msra.mxu0 0.0
    %208 = vmatprep.subr.mxu0 0.0
    %209 = vmatpush1.msra.mxu0 0.0
    %210 = vmatprep.subr.mxu0 0.0
    %211 = vmatpush1.msra.mxu0 0.0
    %212 = vmatprep.subr.mxu0 0.0
    %213 = vmatpush1.msra.mxu0 0.0
    %214 = vmatprep.subr.mxu0 0.0
    %215 = vmatpush1.msra.mxu0 0.0
    %216 = vmatprep.subr.mxu0 0.0
    %217 = vmatpush1.msra.mxu0 0.0
    %218 = vmatprep.subr.mxu0 0.0
    %219 = vmatpush1.msra.mxu0 0.0
    %220 = vmatprep.subr.mxu0 0.0
    %221 = vmatpush1.msra.mxu0 0.0
    %222 = vmatprep.subr.mxu0 0.0
    %223 = vmatpush1.msra.mxu0 0.0
    %224 = vmatprep.subr.mxu0 0.0
    %225 = vmatpush1.msra.mxu0 0.0
    %226 = vmatprep.subr.mxu0 0.0
    %227 = vmatpush1.msra.mxu0 0.0
    %228 = vmatprep.subr.mxu0 0.0
    %229 = vmatpush1.msra.mxu0 0.0
    %230 = vmatprep.subr.mxu0 0.0
    %231 = vmatpush1.msra.mxu0 0.0
    %232 = vmatprep.subr.mxu0 0.0
    %233 = vmatpush1.msra.mxu0 0.0
    %234 = vmatprep.subr.mxu0 0.0
    %235 = vmatpush1.msra.mxu0 0.0
    %236 = vmatprep.subr.mxu0 0.0
    %237 = vmatpush1.msra.mxu0 0.0
    %238 = vmatprep.mubr.f32.mxu0 0.0
    %239 = vmatmul.mubr.f32.gmra.mrb[0].mxu0 %v172
    %v240 = vpop.f32.mrb[0].mxu0
    %v241 = vadd.f32 %v170, %v240
    %v242 = vpop.f32.mrb[0].mxu0
    %243 = vdwg.mxu0
    %v244 = vmax.f32 %v241, 0.0
    %v245 = vld [vmem:[#allocation6] sm:$0xff]
    %v246 = vld [vmem:[#allocation6 + $0x8] sm:$0xff]
    %v247 = vld [vmem:[#allocation6 + $0x10] sm:$0xff]
    %v248 = vld [vmem:[#allocation6 + $0x18] sm:$0xff]
    %v249 = vlaneseq
    %v250 = vshrl.u32 %v249, 7
    %v251 = vsub.s32 2, %v250
    %v252 = vrot.slane %v79, %v251
    %v254 = vsel %vm88, %v244, 0
    %256 = vmatprep.subr.mxu0 0.0
    %257 = vmatpush1.msra.mxu0 %v245
    %258 = vmatprep.subr.mxu0 0.0
    %259 = vmatpush1.msra.mxu0 %v246
    %260 = vmatprep.subr.mxu0 0.0
    %261 = vmatpush1.msra.mxu0 %v247
    %262 = vmatprep.subr.mxu0 0.0
    %263 = vmatpush1.msra.mxu0 %v248
    %264 = vmatprep.subr.mxu0 0.0
    %265 = vmatpush1.msra.mxu0 0.0
    %266 = vmatprep.subr.mxu0 0.0
    %267 = vmatpush1.msra.mxu0 0.0
    %268 = vmatprep.subr.mxu0 0.0
    %269 = vmatpush1.msra.mxu0 0.0
    %270 = vmatprep.subr.mxu0 0.0
    %271 = vmatpush1.msra.mxu0 0.0
    %272 = vmatprep.subr.mxu0 0.0
    %273 = vmatpush1.msra.mxu0 0.0
    %274 = vmatprep.subr.mxu0 0.0
    %275 = vmatpush1.msra.mxu0 0.0
    %276 = vmatprep.subr.mxu0 0.0
    %277 = vmatpush1.msra.mxu0 0.0
    %278 = vmatprep.subr.mxu0 0.0
    %279 = vmatpush1.msra.mxu0 0.0
    %280 = vmatprep.subr.mxu0 0.0
    %281 = vmatpush1.msra.mxu0 0.0
    %282 = vmatprep.subr.mxu0 0.0
    %283 = vmatpush1.msra.mxu0 0.0
    %284 = vmatprep.subr.mxu0 0.0
    %285 = vmatpush1.msra.mxu0 0.0
    %286 = vmatprep.subr.mxu0 0.0
    %287 = vmatpush1.msra.mxu0 0.0
    %288 = vmatprep.subr.mxu0 0.0
    %289 = vmatpush1.msra.mxu0 0.0
    %290 = vmatprep.subr.mxu0 0.0
    %291 = vmatpush1.msra.mxu0 0.0
    %292 = vmatprep.subr.mxu0 0.0
    %293 = vmatpush1.msra.mxu0 0.0
    %294 = vmatprep.subr.mxu0 0.0
    %295 = vmatpush1.msra.mxu0 0.0
    %296 = vmatprep.subr.mxu0 0.0
    %297 = vmatpush1.msra.mxu0 0.0
    %298 = vmatprep.subr.mxu0 0.0
    %299 = vmatpush1.msra.mxu0 0.0
    %300 = vmatprep.subr.mxu0 0.0
    %301 = vmatpush1.msra.mxu0 0.0
    %302 = vmatprep.subr.mxu0 0.0
    %303 = vmatpush1.msra.mxu0 0.0
    %304 = vmatprep.subr.mxu0 0.0
    %305 = vmatpush1.msra.mxu0 0.0
    %306 = vmatprep.subr.mxu0 0.0
    %307 = vmatpush1.msra.mxu0 0.0
    %308 = vmatprep.subr.mxu0 0.0
    %309 = vmatpush1.msra.mxu0 0.0
    %310 = vmatprep.subr.mxu0 0.0
    %311 = vmatpush1.msra.mxu0 0.0
    %312 = vmatprep.subr.mxu0 0.0
    %313 = vmatpush1.msra.mxu0 0.0
    %314 = vmatprep.subr.mxu0 0.0
    %315 = vmatpush1.msra.mxu0 0.0
    %316 = vmatprep.subr.mxu0 0.0
    %317 = vmatpush1.msra.mxu0 0.0
    %318 = vmatprep.subr.mxu0 0.0
    %319 = vmatpush1.msra.mxu0 0.0
    %320 = vmatprep.mubr.f32.mxu0 0.0
    %321 = vmatmul.mubr.f32.gmra.mrb[0].mxu0 %v254
    %v322 = vpop.f32.mrb[0].mxu0
    %v323 = vadd.f32 %v252, %v322
    %v324 = vpop.f32.mrb[0].mxu0
    %325 = vdwg.mxu0
    %v326 = vmax.f32 %v323, 0.0
    %v327 = vld [vmem:[#allocation7] sm:$0xff]
    %v328 = vld [vmem:[#allocation7 + $0x8] sm:$0xff]
    %v329 = vld [vmem:[#allocation7 + $0x10] sm:$0xff]
    %v330 = vld [vmem:[#allocation7 + $0x18] sm:$0xff]
    %v331 = vlaneseq
    %v332 = vshrl.u32 %v331, 7
    %v333 = vsub.s32 3, %v332
    %v334 = vrot.slane %v79, %v333
    %v336 = vsel %vm88, %v326, 0
    %338 = vmatprep.subr.mxu0 0.0
    %339 = vmatpush1.msra.mxu0 %v327
    %340 = vmatprep.subr.mxu0 0.0
    %341 = vmatpush1.msra.mxu0 %v328
    %342 = vmatprep.subr.mxu0 0.0
    %343 = vmatpush1.msra.mxu0 %v329
    %344 = vmatprep.subr.mxu0 0.0
    %345 = vmatpush1.msra.mxu0 %v330
    %346 = vmatprep.subr.mxu0 0.0
    %347 = vmatpush1.msra.mxu0 0.0
    %348 = vmatprep.subr.mxu0 0.0
    %349 = vmatpush1.msra.mxu0 0.0
    %350 = vmatprep.subr.mxu0 0.0
    %351 = vmatpush1.msra.mxu0 0.0
    %352 = vmatprep.subr.mxu0 0.0
    %353 = vmatpush1.msra.mxu0 0.0
    %354 = vmatprep.subr.mxu0 0.0
    %355 = vmatpush1.msra.mxu0 0.0
    %356 = vmatprep.subr.mxu0 0.0
    %357 = vmatpush1.msra.mxu0 0.0
    %358 = vmatprep.subr.mxu0 0.0
    %359 = vmatpush1.msra.mxu0 0.0
    %360 = vmatprep.subr.mxu0 0.0
    %361 = vmatpush1.msra.mxu0 0.0
    %362 = vmatprep.subr.mxu0 0.0
    %363 = vmatpush1.msra.mxu0 0.0
    %364 = vmatprep.subr.mxu0 0.0
    %365 = vmatpush1.msra.mxu0 0.0
    %366 = vmatprep.subr.mxu0 0.0
    %367 = vmatpush1.msra.mxu0 0.0
    %368 = vmatprep.subr.mxu0 0.0
    %369 = vmatpush1.msra.mxu0 0.0
    %370 = vmatprep.subr.mxu0 0.0
    %371 = vmatpush1.msra.mxu0 0.0
    %372 = vmatprep.subr.mxu0 0.0
    %373 = vmatpush1.msra.mxu0 0.0
    %374 = vmatprep.subr.mxu0 0.0
    %375 = vmatpush1.msra.mxu0 0.0
    %376 = vmatprep.subr.mxu0 0.0
    %377 = vmatpush1.msra.mxu0 0.0
    %378 = vmatprep.subr.mxu0 0.0
    %379 = vmatpush1.msra.mxu0 0.0
    %380 = vmatprep.subr.mxu0 0.0
    %381 = vmatpush1.msra.mxu0 0.0
    %382 = vmatprep.subr.mxu0 0.0
    %383 = vmatpush1.msra.mxu0 0.0
    %384 = vmatprep.subr.mxu0 0.0
    %385 = vmatpush1.msra.mxu0 0.0
    %386 = vmatprep.subr.mxu0 0.0
    %387 = vmatpush1.msra.mxu0 0.0
    %388 = vmatprep.subr.mxu0 0.0
    %389 = vmatpush1.msra.mxu0 0.0
    %390 = vmatprep.subr.mxu0 0.0
    %391 = vmatpush1.msra.mxu0 0.0
    %392 = vmatprep.subr.mxu0 0.0
    %393 = vmatpush1.msra.mxu0 0.0
    %394 = vmatprep.subr.mxu0 0.0
    %395 = vmatpush1.msra.mxu0 0.0
    %396 = vmatprep.subr.mxu0 0.0
    %397 = vmatpush1.msra.mxu0 0.0
    %398 = vmatprep.subr.mxu0 0.0
    %399 = vmatpush1.msra.mxu0 0.0
    %400 = vmatprep.subr.mxu0 0.0
    %401 = vmatpush1.msra.mxu0 0.0
    %402 = vmatprep.mubr.f32.mxu0 0.0
    %403 = vmatmul.mubr.f32.gmra.mrb[0].mxu0 %v336
    %v404 = vpop.f32.mrb[0].mxu0
    %v405 = vadd.f32 %v334, %v404
    %v406 = vpop.f32.mrb[0].mxu0
    %407 = vdwg.mxu0
    %v408 = vtanh.pop %v405
    %v409 = vlaneseq
    %v410 = vshrl.u32 %v409, 7
    %v411 = vsub.s32 4, %v410
    %v412 = vrot.slane %v79, %v411
    %v413 = vmul.f32 %v408, %v412
    %414 = vst [vmem:[%s6] sm:$0xff] %v413
    // Predicated region
    $region42: #{actor_forward.1} parent=1 // pred_check
      _
    $region43: #{actor_forward.1} parent=1 // pred_check_branch
      %416 = sbr.rel (0) target = $region45
    $region44: #{actor_forward.1} parent=1 // pred_region
      _
    $region45: #{actor_forward.1} parent=1 // pred_fallthru
      _
    // Predicated region
    $region46: #{actor_forward.1} parent=1 // pred_check
      _
    $region47: #{actor_forward.1} parent=1 // pred_check_branch
      %418 = sbr.rel (0) target = $region49
    $region48: #{actor_forward.1} parent=1 // pred_region
      _
    $region49: #{actor_forward.1} parent=1 // pred_fallthru
      _
    %419 = vsyncpa [#allocation3], 1
    %420 = vsyncpa [#allocation5], 1
    %421 = vsyncpa [#allocation8], 1

</llo_original>
